<compile_context>
chip_gen: v7x
topology: tpu7x:2x2x1
jax: 0.10.0
libtpu: 0.0.40
codegen_flags: <defaults>
</compile_context>

<pallas_src>
import jax
import jax.numpy as jnp
from jax.experimental import pallas as pl
from jax.experimental.pallas import tpu as pltpu


def _round_up(x, m):
    return (x + m - 1) // m * m


def mlp_kernel(x_ref, w1_ref, b1_ref, w2_ref, b2_ref, o_ref):
    # First linear: (tm, d_in_p) @ (d_in_p, d_h_p) -> f32 accumulate, then f32 bias add.
    h = jnp.dot(x_ref[...], w1_ref[...], preferred_element_type=jnp.float32) + b1_ref[...]
    # TODO(synk): nn.Dropout() is active only in training mode; eval-mode semantics (identity)
    # are implemented here. A training variant would use pltpu.prng_seed/prng_random_bits.
    h = jnp.maximum(h, 0.0)  # ReLU
    # Second linear: cast the activation back to bf16 for the MXU, accumulate in f32.
    y = jnp.dot(h.astype(w2_ref.dtype), w2_ref[...], preferred_element_type=jnp.float32)
    o_ref[...] = (y + b2_ref[...]).astype(o_ref.dtype)


def mlp_forward(x_nchw, w1, b1, w2, b2, tm_max=512):
    """x_nchw: (B, C, H, W) f32. w1: (d_in, d_h), b1: (d_h,), w2: (d_h, d_out), b2: (d_out,)."""
    B = x_nchw.shape[0]
    d_in = x_nchw.shape[1] * x_nchw.shape[-2] * x_nchw.shape[-1]
    x2d = x_nchw.reshape(B, d_in)  # same as torch .view(-1, C*H*W)

    d_h = w1.shape[1]
    d_out = w2.shape[1]

    LANE, SUB = 128, 8
    d_in_p = _round_up(d_in, LANE)
    d_h_p = _round_up(d_h, LANE)
    d_out_p = _round_up(d_out, LANE)

    # Batch tiling: tm is a multiple of 8 (sublane) and divides the padded batch.
    b_pad8 = _round_up(B, SUB)
    tm = min(tm_max, b_pad8)
    B_p = _round_up(b_pad8, tm)

    # Zero-pad and cast to bf16 (padded rows/cols contribute exactly zero to the result).
    xp = jnp.zeros((B_p, d_in_p), jnp.bfloat16).at[:B, :d_in].set(x2d.astype(jnp.bfloat16))
    w1p = jnp.zeros((d_in_p, d_h_p), jnp.bfloat16).at[:d_in, :d_h].set(w1.astype(jnp.bfloat16))
    w2p = jnp.zeros((d_h_p, d_out_p), jnp.bfloat16).at[:d_h, :d_out].set(w2.astype(jnp.bfloat16))
    b1p = jnp.zeros((1, d_h_p), jnp.float32).at[0, :d_h].set(b1.astype(jnp.float32))
    b2p = jnp.zeros((1, d_out_p), jnp.float32).at[0, :d_out].set(b2.astype(jnp.float32))

    grid = (B_p // tm,)

    # VMEM budget: derive from the actual chip so v7x (64 MiB) is not over-subscribed while
    # v5e/v6e (128 MiB) can use larger tiles.
    try:
        vmem_cap = pltpu.get_tpu_info().vmem_capacity_bytes
    except Exception:  # pragma: no cover - conservative fallback
        vmem_cap = 64 << 20
    vmem_limit = int(min(vmem_cap * 3 // 4, 100 << 20))

    flops = 2 * B_p * (d_in_p * d_h_p + d_h_p * d_out_p)
    bytes_accessed = (
        xp.size * 2 + w1p.size * 2 + w2p.size * 2 + b1p.size * 4 + b2p.size * 4
        + B_p * d_out_p * 4
    )

    out = pl.pallas_call(
        mlp_kernel,
        out_shape=jax.ShapeDtypeStruct((B_p, d_out_p), jnp.float32),
        grid=grid,
        in_specs=[
            pl.BlockSpec((tm, d_in_p), lambda i: (i, 0)),       # x tile: pipelined over batch
            pl.BlockSpec((d_in_p, d_h_p), lambda i: (0, 0)),    # w1: VMEM-resident
            pl.BlockSpec((1, d_h_p), lambda i: (0, 0)),         # b1: VMEM-resident
            pl.BlockSpec((d_h_p, d_out_p), lambda i: (0, 0)),   # w2: VMEM-resident
            pl.BlockSpec((1, d_out_p), lambda i: (0, 0)),       # b2: VMEM-resident
        ],
        out_specs=pl.BlockSpec((tm, d_out_p), lambda i: (i, 0)),  # lane-dense (128) output tile
        compiler_params=pltpu.CompilerParams(
            dimension_semantics=("parallel",),   # batch axis shards across TCs on v7x
            vmem_limit_bytes=vmem_limit,
        ),
        cost_estimate=pl.CostEstimate(
            flops=flops, transcendentals=0, bytes_accessed=bytes_accessed),
    )(xp, w1p, b1p, w2p, b2p)

    # Strip batch and lane padding back to the logical shape.
    return out[:B, :d_out]


def init_linear_params(key, fan_in, fan_out):
    # Deterministic init mimicking PyTorch nn.Linear: U(-1/sqrt(fan_in), 1/sqrt(fan_in)).
    kw, kb = jax.random.split(key)
    bound = 1.0 / (fan_in ** 0.5)
    w = jax.random.uniform(kw, (fan_in, fan_out), jnp.float32, -bound, bound)
    b = jax.random.uniform(kb, (fan_out,), jnp.float32, -bound, bound)
    return w, b


if __name__ == "__main__":
    key = jax.random.PRNGKey(0)
    kx, k1, k2 = jax.random.split(key, 3)

    # Small shapes consistent with the module: x is (B, C, H, W) -> dim_in = C*H*W.
    B, C, H, W = 2, 4, 16, 16
    dim_in = C * H * W        # 1024
    dim_hidden = 32
    dim_out = 10

    x = jax.random.normal(kx, (B, C, H, W), jnp.float32)
    w1, b1 = init_linear_params(k1, dim_in, dim_hidden)
    w2, b2 = init_linear_params(k2, dim_in=dim_hidden, fan_out=dim_out) if False else init_linear_params(k2, dim_hidden, dim_out)

    out = mlp_forward(x, w1, b1, w2, b2)
    out = jax.block_until_ready(out)

    # Pure-JAX f32 reference (eval-mode dropout = identity). Kernel uses bf16 inputs with f32
    # accumulation, so compare with a bf16-appropriate tolerance.
    x2d = x.reshape(B, dim_in)
    ref = jnp.maximum(x2d @ w1 + b1, 0.0) @ w2 + b2
    assert out.shape == (B, dim_out)
    assert jnp.allclose(out, ref, atol=3e-2, rtol=3e-2), float(jnp.max(jnp.abs(out - ref)))

    print("KERNEL_OK")
</pallas_src>

<mosaic_0001>
module attributes {stable_mosaic.version = 11 : i64} {
  func.func @mlp_kernel(%arg0: i32, %arg1: memref<8x1024xbf16, #tpu.memory_space<vmem>>, %arg2: memref<1024x128xbf16, #tpu.memory_space<vmem>>, %arg3: memref<1x128xf32, #tpu.memory_space<vmem>>, %arg4: memref<128x128xbf16, #tpu.memory_space<vmem>>, %arg5: memref<1x128xf32, #tpu.memory_space<vmem>>, %arg6: memref<8x128xf32, #tpu.memory_space<vmem>>) attributes {dimension_semantics = [#tpu.dimension_semantics<parallel>], iteration_bounds = array<i64: 1>, scalar_prefetch = 0 : i64, scratch_operands = 0 : i64, tpu.core_type = #tpu.core_type<tc>, window_params = [{transform_indices = @transform_0, window_bounds = array<i64: 8, 1024>}, {pipeline_mode = #tpu.pipeline_mode<synchronous>, transform_indices = @transform_1, window_bounds = array<i64: 1024, 128>}, {pipeline_mode = #tpu.pipeline_mode<synchronous>, transform_indices = @transform_2, window_bounds = array<i64: 1, 128>}, {pipeline_mode = #tpu.pipeline_mode<synchronous>, transform_indices = @transform_3, window_bounds = array<i64: 128, 128>}, {pipeline_mode = #tpu.pipeline_mode<synchronous>, transform_indices = @transform_4, window_bounds = array<i64: 1, 128>}, {transform_indices = @transform_5, window_bounds = array<i64: 8, 128>}]} {
    %c0 = arith.constant 0 : index
    %c0_0 = arith.constant 0 : index
    %0 = vector.load %arg1[%c0, %c0_0] : memref<8x1024xbf16, #tpu.memory_space<vmem>>, vector<8x1024xbf16>
    %c0_1 = arith.constant 0 : index
    %c0_2 = arith.constant 0 : index
    %1 = vector.load %arg2[%c0_1, %c0_2] : memref<1024x128xbf16, #tpu.memory_space<vmem>>, vector<1024x128xbf16>
    %cst = arith.constant dense<0.000000e+00> : vector<8x128xf32>
    %2 = tpu.matmul %0, %1, %cst {dimension_numbers = #tpu.dot_dimension_numbers<[1], [0], [0], [1], [0, 0, 1, 1], [], []>} : vector<8x1024xbf16>, vector<1024x128xbf16>, vector<8x128xf32> -> vector<8x128xf32>
    %c0_3 = arith.constant 0 : index
    %c0_4 = arith.constant 0 : index
    %3 = vector.load %arg3[%c0_3, %c0_4] : memref<1x128xf32, #tpu.memory_space<vmem>>, vector<1x128xf32>
    %4 = vector.broadcast %3 : vector<1x128xf32> to vector<8x128xf32>
    %5 = arith.addf %2, %4 : vector<8x128xf32>
    %cst_5 = arith.constant 0.000000e+00 : f32
    %6 = vector.broadcast %cst_5 : f32 to vector<8x128xf32>
    %7 = arith.maximumf %5, %6 : vector<8x128xf32>
    %8 = arith.truncf %7 : vector<8x128xf32> to vector<8x128xbf16>
    %c0_6 = arith.constant 0 : index
    %c0_7 = arith.constant 0 : index
    %9 = vector.load %arg4[%c0_6, %c0_7] : memref<128x128xbf16, #tpu.memory_space<vmem>>, vector<128x128xbf16>
    %cst_8 = arith.constant dense<0.000000e+00> : vector<8x128xf32>
    %10 = tpu.matmul %8, %9, %cst_8 {dimension_numbers = #tpu.dot_dimension_numbers<[1], [0], [0], [1], [0, 0, 1, 1], [], []>} : vector<8x128xbf16>, vector<128x128xbf16>, vector<8x128xf32> -> vector<8x128xf32>
    %c0_9 = arith.constant 0 : index
    %c0_10 = arith.constant 0 : index
    %11 = vector.load %arg5[%c0_9, %c0_10] : memref<1x128xf32, #tpu.memory_space<vmem>>, vector<1x128xf32>
    %12 = vector.broadcast %11 : vector<1x128xf32> to vector<8x128xf32>
    %13 = arith.addf %10, %12 : vector<8x128xf32>
    %c0_11 = arith.constant 0 : index
    %c0_12 = arith.constant 0 : index
    %14 = vector.load %arg6[%c0_11, %c0_12] : memref<8x128xf32, #tpu.memory_space<vmem>>, vector<8x128xf32>
    tpu.vector_store %arg6[%c0_11, %c0_12], %13 {strides = array<i32>} : memref<8x128xf32, #tpu.memory_space<vmem>>, vector<8x128xf32>,
    return
  }
  func.func @transform_0(%arg0: i32) -> (i32, i32) {
    %c0_i32 = arith.constant 0 : i32
    %c0_i32_0 = arith.constant 0 : i32
    return %arg0, %c0_i32 : i32, i32
  }
  func.func @transform_1(%arg0: i32) -> (i32, i32) {
    %c0_i32 = arith.constant 0 : i32
    %c0_i32_0 = arith.constant 0 : i32
    %c0_i32_1 = arith.constant 0 : i32
    return %c0_i32, %c0_i32_0 : i32, i32
  }
  func.func @transform_2(%arg0: i32) -> (i32, i32) {
    %c0_i32 = arith.constant 0 : i32
    %c0_i32_0 = arith.constant 0 : i32
    %c0_i32_1 = arith.constant 0 : i32
    return %c0_i32, %c0_i32_0 : i32, i32
  }
  func.func @transform_3(%arg0: i32) -> (i32, i32) {
    %c0_i32 = arith.constant 0 : i32
    %c0_i32_0 = arith.constant 0 : i32
    %c0_i32_1 = arith.constant 0 : i32
    return %c0_i32, %c0_i32_0 : i32, i32
  }
  func.func @transform_4(%arg0: i32) -> (i32, i32) {
    %c0_i32 = arith.constant 0 : i32
    %c0_i32_0 = arith.constant 0 : i32
    %c0_i32_1 = arith.constant 0 : i32
    return %c0_i32, %c0_i32_0 : i32, i32
  }
  func.func @transform_5(%arg0: i32) -> (i32, i32) {
    %c0_i32 = arith.constant 0 : i32
    %c0_i32_0 = arith.constant 0 : i32
    return %arg0, %c0_i32 : i32, i32
  }
}

</mosaic_0001>

<llo_original>
// kernel: tpu_custom_call.1
$region0: #{tpu_custom_call.1}
  #allocation0 [shape = 'u32[]', space=smem, size = 0x4, offset = 0x4, fixed_abs, tag = 'smem constant byte address 0x4 - core index']
  #allocation1 [shape = 'u32[144,128]{1,0:T(1,128)}', space=vmem, size = 0x12000, scoped, tag = 'internal scratch']
  %s0 = inlined_call_operand.hbm [shape: bf16[8,1024], index: 0, kind: input, shape index: {}]
  %s1 = inlined_call_operand.hbm [shape: bf16[1024,128], index: 1, kind: input, shape index: {}]
  %s2 = inlined_call_operand.vmem [shape: f32[1,128], index: 2, kind: input, shape index: {}]
  %s3 = inlined_call_operand.hbm [shape: bf16[128,128], index: 3, kind: input, shape index: {}]
  %s4 = inlined_call_operand.vmem [shape: f32[1,128], index: 4, kind: input, shape index: {}]
  %s5 = inlined_call_operand.hbm [shape: f32[8,128], index: 5, kind: output, shape index: {}]
  %s6 = sld [smem:[#allocation0]]
  $region42: #{tpu_custom_call.1} parent=0
    _
  %s8 = ssub.s32 1, %s6
  %s9 = scalar_select 0, %s8, %s6
  $region1: #{tpu_custom_call.1} parent=0
    #allocation2 [shape = 'u8[16384]{0}', space=vmem, size = 0x4000, scoped, tag = 'input window, operand 0, single buffered']
    #allocation3 [shape = 's32[1]{0}', space=sflag, size = 0x4, scoped, tag = 'scoped memory for tpu_custom_call.1']
    #allocation4 [shape = 's32[1]{0}', space=sflag, size = 0x4, scoped, tag = 'scoped memory for tpu_custom_call.1']
    #allocation5 [shape = 'u8[262144]{0}', space=vmem, size = 0x40000, scoped, tag = 'input window, operand 1, single buffered']
    #allocation6 [shape = 's32[1]{0}', space=sflag, size = 0x4, scoped, tag = 'scoped memory for tpu_custom_call.1']
    #allocation7 [shape = 'u8[32768]{0}', space=vmem, size = 0x8000, scoped, tag = 'input window, operand 3, single buffered']
    #allocation8 [shape = 'u8[4096]{0}', space=vmem, size = 0x1000, scoped, tag = 'output window, operand 0, single buffered']
    %10 = vsyncpa [#allocation3], 0
    %11 = vsyncpa [#allocation6], 0
    %12 = vsyncpa [#allocation4], 0
    // Predicated region
    $region2: #{tpu_custom_call.1} parent=1 // pred_check
      _
    $region3: #{tpu_custom_call.1} parent=1 // pred_check_branch
      %14 = sbr.rel (0) target = $region5
    $region4: #{tpu_custom_call.1} parent=1 // pred_region
      %s16 = ssub.s32 512, 512
      %17 = vsyncadd [#allocation3], %s16
      %s19 = sshll.u32 [#allocation2], 4
      %s20 = int_to_ptr.vmem [resolvable:$true] %s19
      %22 = dma.hbm_to_vmem [thread:$0]  %s0, 512, %s20, [#allocation3]
    $region5: #{tpu_custom_call.1} parent=1 // pred_fallthru
      _
    // Predicated region
    $region6: #{tpu_custom_call.1} parent=1 // pred_check
      _
    $region7: #{tpu_custom_call.1} parent=1 // pred_check_branch
      %24 = sbr.rel (0) target = $region9
    $region8: #{tpu_custom_call.1} parent=1 // pred_region
      %s26 = ssub.s32 8192, 8192
      %27 = vsyncadd [#allocation6], %s26
      %s28 = sshll.u32 [#allocation5], 4
      %s29 = int_to_ptr.vmem [resolvable:$true] %s28
      %34 = dma.hbm_to_vmem [thread:$0]  %s1, 8192, %s29, [#allocation6], 64, 64, 4
    $region9: #{tpu_custom_call.1} parent=1 // pred_fallthru
      _
    // Predicated region
    $region10: #{tpu_custom_call.1} parent=1 // pred_check
      _
    $region11: #{tpu_custom_call.1} parent=1 // pred_check_branch
      %36 = sbr.rel (0) target = $region13
    $region12: #{tpu_custom_call.1} parent=1 // pred_region
      _
    $region13: #{tpu_custom_call.1} parent=1 // pred_fallthru
      _
    // Predicated region
    $region14: #{tpu_custom_call.1} parent=1 // pred_check
      _
    $region15: #{tpu_custom_call.1} parent=1 // pred_check_branch
      %38 = sbr.rel (0) target = $region17
    $region16: #{tpu_custom_call.1} parent=1 // pred_region
      %s40 = ssub.s32 1024, 1024
      %41 = vsyncadd [#allocation6], %s40
      %s42 = sshll.u32 [#allocation7], 4
      %s43 = int_to_ptr.vmem [resolvable:$true] %s42
      %48 = dma.hbm_to_vmem [thread:$0]  %s3, 1024, %s43, [#allocation6], 64, 64, 4
    $region17: #{tpu_custom_call.1} parent=1 // pred_fallthru
      _
    // Predicated region
    $region18: #{tpu_custom_call.1} parent=1 // pred_check
      _
    $region19: #{tpu_custom_call.1} parent=1 // pred_check_branch
      %50 = sbr.rel (0) target = $region21
    $region20: #{tpu_custom_call.1} parent=1 // pred_region
      _
    $region21: #{tpu_custom_call.1} parent=1 // pred_fallthru
      _
    // Predicated region
    $region22: #{tpu_custom_call.1} parent=1 // pred_check
      _
    $region23: #{tpu_custom_call.1} parent=1 // pred_check_branch
      %52 = sbr.rel (0) target = $region25
    $region24: #{tpu_custom_call.1} parent=1 // pred_region
      %53 = dma.done [#allocation3], 512
    $region25: #{tpu_custom_call.1} parent=1 // pred_fallthru
      _
    // Predicated region
    $region26: #{tpu_custom_call.1} parent=1 // pred_check
      _
    $region27: #{tpu_custom_call.1} parent=1 // pred_check_branch
      %55 = sbr.rel (0) target = $region29
    $region28: #{tpu_custom_call.1} parent=1 // pred_region
      %56 = dma.done [#allocation6], 8192
    $region29: #{tpu_custom_call.1} parent=1 // pred_fallthru
      _
    // Predicated region
    $region30: #{tpu_custom_call.1} parent=1 // pred_check
      _
    $region31: #{tpu_custom_call.1} parent=1 // pred_check_branch
      %58 = sbr.rel (0) target = $region33
    $region32: #{tpu_custom_call.1} parent=1 // pred_region
      %59 = dma.done [#allocation6], 1024
    $region33: #{tpu_custom_call.1} parent=1 // pred_fallthru
      _
    %v61 = vld [vmem:[#allocation2] sm:$0xff]
    %v62 = vld [vmem:[#allocation2 + $0x8] sm:$0xff]
    %v63 = vld [vmem:[#allocation2 + $0x10] sm:$0xff]
    %v64 = vld [vmem:[#allocation2 + $0x18] sm:$0xff]
    %v65 = vld [vmem:[#allocation5] sm:$0xf]
    %v66 = vld [vmem:[#allocation5 + $0x4] sm:$0xf]
    %v67 = vld [vmem:[#allocation5 + $0x8] sm:$0xf]
    %v68 = vld [vmem:[#allocation5 + $0xc] sm:$0xf]
    %v69 = vld [vmem:[#allocation5 + $0x10] sm:$0xf]
    %v70 = vld [vmem:[#allocation5 + $0x14] sm:$0xf]
    %v71 = vld [vmem:[#allocation5 + $0x18] sm:$0xf]
    %v72 = vld [vmem:[#allocation5 + $0x1c] sm:$0xf]
    %v73 = vld [vmem:[#allocation5 + $0x20] sm:$0xf]
    %v74 = vld [vmem:[#allocation5 + $0x24] sm:$0xf]
    %v75 = vld [vmem:[#allocation5 + $0x28] sm:$0xf]
    %v76 = vld [vmem:[#allocation5 + $0x2c] sm:$0xf]
    %v77 = vld [vmem:[#allocation5 + $0x30] sm:$0xf]
    %v78 = vld [vmem:[#allocation5 + $0x34] sm:$0xf]
    %v79 = vld [vmem:[#allocation5 + $0x38] sm:$0xf]
    %v80 = vld [vmem:[#allocation5 + $0x3c] sm:$0xf]
    %v81 = vld [vmem:[#allocation5 + $0x40] sm:$0xf]
    %v82 = vld [vmem:[#allocation5 + $0x44] sm:$0xf]
    %v83 = vld [vmem:[#allocation5 + $0x48] sm:$0xf]
    %v84 = vld [vmem:[#allocation5 + $0x4c] sm:$0xf]
    %v85 = vld [vmem:[#allocation5 + $0x50] sm:$0xf]
    %v86 = vld [vmem:[#allocation5 + $0x54] sm:$0xf]
    %v87 = vld [vmem:[#allocation5 + $0x58] sm:$0xf]
    %v88 = vld [vmem:[#allocation5 + $0x5c] sm:$0xf]
    %v89 = vld [vmem:[#allocation5 + $0x60] sm:$0xf]
    %v90 = vld [vmem:[#allocation5 + $0x64] sm:$0xf]
    %v91 = vld [vmem:[#allocation5 + $0x68] sm:$0xf]
    %v92 = vld [vmem:[#allocation5 + $0x6c] sm:$0xf]
    %v93 = vld [vmem:[#allocation5 + $0x70] sm:$0xf]
    %v94 = vld [vmem:[#allocation5 + $0x74] sm:$0xf]
    %v95 = vld [vmem:[#allocation5 + $0x78] sm:$0xf]
    %v96 = vld [vmem:[#allocation5 + $0x7c] sm:$0xf]
    %v97 = vld [vmem:[#allocation5 + $0x80] sm:$0xf]
    %v98 = vld [vmem:[#allocation5 + $0x84] sm:$0xf]
    %v99 = vld [vmem:[#allocation5 + $0x88] sm:$0xf]
    %v100 = vld [vmem:[#allocation5 + $0x8c] sm:$0xf]
    %v101 = vld [vmem:[#allocation5 + $0x90] sm:$0xf]
    %v102 = vld [vmem:[#allocation5 + $0x94] sm:$0xf]
    %v103 = vld [vmem:[#allocation5 + $0x98] sm:$0xf]
    %v104 = vld [vmem:[#allocation5 + $0x9c] sm:$0xf]
    %v105 = vld [vmem:[#allocation5 + $0xa0] sm:$0xf]
    %v106 = vld [vmem:[#allocation5 + $0xa4] sm:$0xf]
    %v107 = vld [vmem:[#allocation5 + $0xa8] sm:$0xf]
    %v108 = vld [vmem:[#allocation5 + $0xac] sm:$0xf]
    %v109 = vld [vmem:[#allocation5 + $0xb0] sm:$0xf]
    %v110 = vld [vmem:[#allocation5 + $0xb4] sm:$0xf]
    %v111 = vld [vmem:[#allocation5 + $0xb8] sm:$0xf]
    %v112 = vld [vmem:[#allocation5 + $0xbc] sm:$0xf]
    %v113 = vld [vmem:[#allocation5 + $0xc0] sm:$0xf]
    %v114 = vld [vmem:[#allocation5 + $0xc4] sm:$0xf]
    %v115 = vld [vmem:[#allocation5 + $0xc8] sm:$0xf]
    %v116 = vld [vmem:[#allocation5 + $0xcc] sm:$0xf]
    %v117 = vld [vmem:[#allocation5 + $0xd0] sm:$0xf]
    %v118 = vld [vmem:[#allocation5 + $0xd4] sm:$0xf]
    %v119 = vld [vmem:[#allocation5 + $0xd8] sm:$0xf]
    %v120 = vld [vmem:[#allocation5 + $0xdc] sm:$0xf]
    %v121 = vld [vmem:[#allocation5 + $0xe0] sm:$0xf]
    %v122 = vld [vmem:[#allocation5 + $0xe4] sm:$0xf]
    %v123 = vld [vmem:[#allocation5 + $0xe8] sm:$0xf]
    %v124 = vld [vmem:[#allocation5 + $0xec] sm:$0xf]
    %v125 = vld [vmem:[#allocation5 + $0xf0] sm:$0xf]
    %v126 = vld [vmem:[#allocation5 + $0xf4] sm:$0xf]
    %v127 = vld [vmem:[#allocation5 + $0xf8] sm:$0xf]
    %v128 = vld [vmem:[#allocation5 + $0xfc] sm:$0xf]
    %v129 = vld [vmem:[#allocation5 + $0x100] sm:$0xf]
    %v130 = vld [vmem:[#allocation5 + $0x104] sm:$0xf]
    %v131 = vld [vmem:[#allocation5 + $0x108] sm:$0xf]
    %v132 = vld [vmem:[#allocation5 + $0x10c] sm:$0xf]
    %v133 = vld [vmem:[#allocation5 + $0x110] sm:$0xf]
    %v134 = vld [vmem:[#allocation5 + $0x114] sm:$0xf]
    %v135 = vld [vmem:[#allocation5 + $0x118] sm:$0xf]
    %v136 = vld [vmem:[#allocation5 + $0x11c] sm:$0xf]
    %v137 = vld [vmem:[#allocation5 + $0x120] sm:$0xf]
    %v138 = vld [vmem:[#allocation5 + $0x124] sm:$0xf]
    %v139 = vld [vmem:[#allocation5 + $0x128] sm:$0xf]
    %v140 = vld [vmem:[#allocation5 + $0x12c] sm:$0xf]
    %v141 = vld [vmem:[#allocation5 + $0x130] sm:$0xf]
    %v142 = vld [vmem:[#allocation5 + $0x134] sm:$0xf]
    %v143 = vld [vmem:[#allocation5 + $0x138] sm:$0xf]
    %v144 = vld [vmem:[#allocation5 + $0x13c] sm:$0xf]
    %v145 = vld [vmem:[#allocation5 + $0x140] sm:$0xf]
    %v146 = vld [vmem:[#allocation5 + $0x144] sm:$0xf]
    %v147 = vld [vmem:[#allocation5 + $0x148] sm:$0xf]
    %v148 = vld [vmem:[#allocation5 + $0x14c] sm:$0xf]
    %v149 = vld [vmem:[#allocation5 + $0x150] sm:$0xf]
    %v150 = vld [vmem:[#allocation5 + $0x154] sm:$0xf]
    %v151 = vld [vmem:[#allocation5 + $0x158] sm:$0xf]
    %v152 = vld [vmem:[#allocation5 + $0x15c] sm:$0xf]
    %v153 = vld [vmem:[#allocation5 + $0x160] sm:$0xf]
    %v154 = vld [vmem:[#allocation5 + $0x164] sm:$0xf]
    %v155 = vld [vmem:[#allocation5 + $0x168] sm:$0xf]
    %v156 = vld [vmem:[#allocation5 + $0x16c] sm:$0xf]
    %v157 = vld [vmem:[#allocation5 + $0x170] sm:$0xf]
    %v158 = vld [vmem:[#allocation5 + $0x174] sm:$0xf]
    %v159 = vld [vmem:[#allocation5 + $0x178] sm:$0xf]
    %v160 = vld [vmem:[#allocation5 + $0x17c] sm:$0xf]
    %v161 = vld [vmem:[#allocation5 + $0x180] sm:$0xf]
    %v162 = vld [vmem:[#allocation5 + $0x184] sm:$0xf]
    %v163 = vld [vmem:[#allocation5 + $0x188] sm:$0xf]
    %v164 = vld [vmem:[#allocation5 + $0x18c] sm:$0xf]
    %v165 = vld [vmem:[#allocation5 + $0x190] sm:$0xf]
    %v166 = vld [vmem:[#allocation5 + $0x194] sm:$0xf]
    %v167 = vld [vmem:[#allocation5 + $0x198] sm:$0xf]
    %v168 = vld [vmem:[#allocation5 + $0x19c] sm:$0xf]
    %v169 = vld [vmem:[#allocation5 + $0x1a0] sm:$0xf]
    %v170 = vld [vmem:[#allocation5 + $0x1a4] sm:$0xf]
    %v171 = vld [vmem:[#allocation5 + $0x1a8] sm:$0xf]
    %v172 = vld [vmem:[#allocation5 + $0x1ac] sm:$0xf]
    %v173 = vld [vmem:[#allocation5 + $0x1b0] sm:$0xf]
    %v174 = vld [vmem:[#allocation5 + $0x1b4] sm:$0xf]
    %v175 = vld [vmem:[#allocation5 + $0x1b8] sm:$0xf]
    %v176 = vld [vmem:[#allocation5 + $0x1bc] sm:$0xf]
    %v177 = vld [vmem:[#allocation5 + $0x1c0] sm:$0xf]
    %v178 = vld [vmem:[#allocation5 + $0x1c4] sm:$0xf]
    %v179 = vld [vmem:[#allocation5 + $0x1c8] sm:$0xf]
    %v180 = vld [vmem:[#allocation5 + $0x1cc] sm:$0xf]
    %v181 = vld [vmem:[#allocation5 + $0x1d0] sm:$0xf]
    %v182 = vld [vmem:[#allocation5 + $0x1d4] sm:$0xf]
    %v183 = vld [vmem:[#allocation5 + $0x1d8] sm:$0xf]
    %v184 = vld [vmem:[#allocation5 + $0x1dc] sm:$0xf]
    %v185 = vld [vmem:[#allocation5 + $0x1e0] sm:$0xf]
    %v186 = vld [vmem:[#allocation5 + $0x1e4] sm:$0xf]
    %v187 = vld [vmem:[#allocation5 + $0x1e8] sm:$0xf]
    %v188 = vld [vmem:[#allocation5 + $0x1ec] sm:$0xf]
    %v189 = vld [vmem:[#allocation5 + $0x1f0] sm:$0xf]
    %v190 = vld [vmem:[#allocation5 + $0x1f4] sm:$0xf]
    %v191 = vld [vmem:[#allocation5 + $0x1f8] sm:$0xf]
    %v192 = vld [vmem:[#allocation5 + $0x1fc] sm:$0xf]
    %v193 = vld [vmem:[%s2] sm:$0x1]
    %v195 = vlaneseq
    %v196 = vshrl.u32 %v195, 7
    %v197 = vsub.s32 0, %v196
    %v198 = vrot.slane %v193, %v197
    %v204 = vunpack.c.l.b16 %v61
    %v205 = vunpack.c.h.b16 %v61
    %v206 = vunpack.c.l.b16 %v62
    %v207 = vunpack.c.h.b16 %v62
    %v208 = vunpack.c.l.b16 %v63
    %v209 = vunpack.c.h.b16 %v63
    %v210 = vunpack.c.l.b16 %v64
    %v211 = vunpack.c.h.b16 %v64
    %v212 = vpack.c.b16 %v204, %v204
    %v213 = vpack.c.b16 %v205, %v205
    %v214 = vpack.c.b16 %v206, %v206
    %v215 = vpack.c.b16 %v207, %v207
    %v216 = vpack.c.b16 %v208, %v208
    %v217 = vpack.c.b16 %v209, %v209
    %v218 = vpack.c.b16 %v210, %v210
    %v219 = vpack.c.b16 %v211, %v211
    %v356 = vunpack.c.l.b16 %v65
    %v357 = vunpack.c.l.b16 %v66
    %v358 = vunpack.c.l.b16 %v67
    %v359 = vunpack.c.l.b16 %v68
    %v360 = vunpack.c.l.b16 %v69
    %v361 = vunpack.c.l.b16 %v70
    %v362 = vunpack.c.l.b16 %v71
    %v363 = vunpack.c.l.b16 %v72
    %v364 = vunpack.c.l.b16 %v73
    %v365 = vunpack.c.l.b16 %v74
    %v366 = vunpack.c.l.b16 %v75
    %v367 = vunpack.c.l.b16 %v76
    %v368 = vunpack.c.l.b16 %v77
    %v369 = vunpack.c.l.b16 %v78
    %v370 = vunpack.c.l.b16 %v79
    %v371 = vunpack.c.l.b16 %v80
    %v372 = vunpack.c.l.b16 %v81
    %v373 = vunpack.c.l.b16 %v82
    %v374 = vunpack.c.l.b16 %v83
    %v375 = vunpack.c.l.b16 %v84
    %v376 = vunpack.c.l.b16 %v85
    %v377 = vunpack.c.l.b16 %v86
    %v378 = vunpack.c.l.b16 %v87
    %v379 = vunpack.c.l.b16 %v88
    %v380 = vunpack.c.l.b16 %v89
    %v381 = vunpack.c.l.b16 %v90
    %v382 = vunpack.c.l.b16 %v91
    %v383 = vunpack.c.l.b16 %v92
    %v384 = vunpack.c.l.b16 %v93
    %v385 = vunpack.c.l.b16 %v94
    %v386 = vunpack.c.l.b16 %v95
    %v387 = vunpack.c.l.b16 %v96
    %v388 = vunpack.c.l.b16 %v97
    %v389 = vunpack.c.l.b16 %v98
    %v390 = vunpack.c.l.b16 %v99
    %v391 = vunpack.c.l.b16 %v100
    %v392 = vunpack.c.l.b16 %v101
    %v393 = vunpack.c.l.b16 %v102
    %v394 = vunpack.c.l.b16 %v103
    %v395 = vunpack.c.l.b16 %v104
    %v396 = vunpack.c.l.b16 %v105
    %v397 = vunpack.c.l.b16 %v106
    %v398 = vunpack.c.l.b16 %v107
    %v399 = vunpack.c.l.b16 %v108
    %v400 = vunpack.c.l.b16 %v109
    %v401 = vunpack.c.l.b16 %v110
    %v402 = vunpack.c.l.b16 %v111
    %v403 = vunpack.c.l.b16 %v112
    %v404 = vunpack.c.l.b16 %v113
    %v405 = vunpack.c.l.b16 %v114
    %v406 = vunpack.c.l.b16 %v115
    %v407 = vunpack.c.l.b16 %v116
    %v408 = vunpack.c.l.b16 %v117
    %v409 = vunpack.c.l.b16 %v118
    %v410 = vunpack.c.l.b16 %v119
    %v411 = vunpack.c.l.b16 %v120
    %v412 = vunpack.c.l.b16 %v121
    %v413 = vunpack.c.l.b16 %v122
    %v414 = vunpack.c.l.b16 %v123
    %v415 = vunpack.c.l.b16 %v124
    %v416 = vunpack.c.l.b16 %v125
    %v417 = vunpack.c.l.b16 %v126
    %v418 = vunpack.c.l.b16 %v127
    %v419 = vunpack.c.l.b16 %v128
    %v420 = vunpack.c.l.b16 %v129
    %v421 = vunpack.c.l.b16 %v130
    %v422 = vunpack.c.l.b16 %v131
    %v423 = vunpack.c.l.b16 %v132
    %v424 = vunpack.c.l.b16 %v133
    %v425 = vunpack.c.l.b16 %v134
    %v426 = vunpack.c.l.b16 %v135
    %v427 = vunpack.c.l.b16 %v136
    %v428 = vunpack.c.l.b16 %v137
    %v429 = vunpack.c.l.b16 %v138
    %v430 = vunpack.c.l.b16 %v139
    %v431 = vunpack.c.l.b16 %v140
    %v432 = vunpack.c.l.b16 %v141
    %v433 = vunpack.c.l.b16 %v142
    %v434 = vunpack.c.l.b16 %v143
    %v435 = vunpack.c.l.b16 %v144
    %v436 = vunpack.c.l.b16 %v145
    %v437 = vunpack.c.l.b16 %v146
    %v438 = vunpack.c.l.b16 %v147
    %v439 = vunpack.c.l.b16 %v148
    %v440 = vunpack.c.l.b16 %v149
    %v441 = vunpack.c.l.b16 %v150
    %v442 = vunpack.c.l.b16 %v151
    %v443 = vunpack.c.l.b16 %v152
    %v444 = vunpack.c.l.b16 %v153
    %v445 = vunpack.c.l.b16 %v154
    %v446 = vunpack.c.l.b16 %v155
    %v447 = vunpack.c.l.b16 %v156
    %v448 = vunpack.c.l.b16 %v157
    %v449 = vunpack.c.l.b16 %v158
    %v450 = vunpack.c.l.b16 %v159
    %v451 = vunpack.c.l.b16 %v160
    %v452 = vunpack.c.l.b16 %v161
    %v453 = vunpack.c.l.b16 %v162
    %v454 = vunpack.c.l.b16 %v163
    %v455 = vunpack.c.l.b16 %v164
    %v456 = vunpack.c.l.b16 %v165
    %v457 = vunpack.c.l.b16 %v166
    %v458 = vunpack.c.l.b16 %v167
    %v459 = vunpack.c.l.b16 %v168
    %v460 = vunpack.c.l.b16 %v169
    %v461 = vunpack.c.l.b16 %v170
    %v462 = vunpack.c.l.b16 %v171
    %v463 = vunpack.c.l.b16 %v172
    %v464 = vunpack.c.l.b16 %v173
    %v465 = vunpack.c.l.b16 %v174
    %v466 = vunpack.c.l.b16 %v175
    %v467 = vunpack.c.l.b16 %v176
    %v468 = vunpack.c.l.b16 %v177
    %v469 = vunpack.c.l.b16 %v178
    %v470 = vunpack.c.l.b16 %v179
    %v471 = vunpack.c.l.b16 %v180
    %v472 = vunpack.c.l.b16 %v181
    %v473 = vunpack.c.l.b16 %v182
    %v474 = vunpack.c.l.b16 %v183
    %v475 = vunpack.c.l.b16 %v184
    %v476 = vunpack.c.l.b16 %v185
    %v477 = vunpack.c.l.b16 %v186
    %v478 = vunpack.c.l.b16 %v187
    %v479 = vunpack.c.l.b16 %v188
    %v480 = vunpack.c.l.b16 %v189
    %v481 = vunpack.c.l.b16 %v190
    %v482 = vunpack.c.l.b16 %v191
    %v483 = vunpack.c.l.b16 %v192
    %v484 = vpack.c.b16 %v357, %v356
    %v485 = vpack.c.b16 %v359, %v358
    %v486 = vpack.c.b16 %v361, %v360
    %v487 = vpack.c.b16 %v363, %v362
    %v488 = vpack.c.b16 %v365, %v364
    %v489 = vpack.c.b16 %v367, %v366
    %v490 = vpack.c.b16 %v369, %v368
    %v491 = vpack.c.b16 %v371, %v370
    %v492 = vpack.c.b16 %v373, %v372
    %v493 = vpack.c.b16 %v375, %v374
    %v494 = vpack.c.b16 %v377, %v376
    %v495 = vpack.c.b16 %v379, %v378
    %v496 = vpack.c.b16 %v381, %v380
    %v497 = vpack.c.b16 %v383, %v382
    %v498 = vpack.c.b16 %v385, %v384
    %v499 = vpack.c.b16 %v387, %v386
    %v500 = vpack.c.b16 %v389, %v388
    %v501 = vpack.c.b16 %v391, %v390
    %v502 = vpack.c.b16 %v393, %v392
    %v503 = vpack.c.b16 %v395, %v394
    %v504 = vpack.c.b16 %v397, %v396
    %v505 = vpack.c.b16 %v399, %v398
    %v506 = vpack.c.b16 %v401, %v400
    %v507 = vpack.c.b16 %v403, %v402
    %v508 = vpack.c.b16 %v405, %v404
    %v509 = vpack.c.b16 %v407, %v406
    %v510 = vpack.c.b16 %v409, %v408
    %v511 = vpack.c.b16 %v411, %v410
    %v512 = vpack.c.b16 %v413, %v412
    %v513 = vpack.c.b16 %v415, %v414
    %v514 = vpack.c.b16 %v417, %v416
    %v515 = vpack.c.b16 %v419, %v418
    %v516 = vpack.c.b16 %v421, %v420
    %v517 = vpack.c.b16 %v423, %v422
    %v518 = vpack.c.b16 %v425, %v424
    %v519 = vpack.c.b16 %v427, %v426
    %v520 = vpack.c.b16 %v429, %v428
    %v521 = vpack.c.b16 %v431, %v430
    %v522 = vpack.c.b16 %v433, %v432
    %v523 = vpack.c.b16 %v435, %v434
    %v524 = vpack.c.b16 %v437, %v436
    %v525 = vpack.c.b16 %v439, %v438
    %v526 = vpack.c.b16 %v441, %v440
    %v527 = vpack.c.b16 %v443, %v442
    %v528 = vpack.c.b16 %v445, %v444
    %v529 = vpack.c.b16 %v447, %v446
    %v530 = vpack.c.b16 %v449, %v448
    %v531 = vpack.c.b16 %v451, %v450
    %v532 = vpack.c.b16 %v453, %v452
    %v533 = vpack.c.b16 %v455, %v454
    %v534 = vpack.c.b16 %v457, %v456
    %v535 = vpack.c.b16 %v459, %v458
    %v536 = vpack.c.b16 %v461, %v460
    %v537 = vpack.c.b16 %v463, %v462
    %v538 = vpack.c.b16 %v465, %v464
    %v539 = vpack.c.b16 %v467, %v466
    %v540 = vpack.c.b16 %v469, %v468
    %v541 = vpack.c.b16 %v471, %v470
    %v542 = vpack.c.b16 %v473, %v472
    %v543 = vpack.c.b16 %v475, %v474
    %v544 = vpack.c.b16 %v477, %v476
    %v545 = vpack.c.b16 %v479, %v478
    %v546 = vpack.c.b16 %v481, %v480
    %v547 = vpack.c.b16 %v483, %v482
    %612 = vmatprep.subr.bf16.mxu0 0
    %613 = vmatpush1.bf16.msra.mxu0 %v484
    %614 = vmatprep.subr.bf16.mxu0 0
    %615 = vmatpush1.bf16.msra.mxu0 %v485
    %616 = vmatprep.subr.bf16.mxu0 0
    %617 = vmatpush1.bf16.msra.mxu0 %v486
    %618 = vmatprep.subr.bf16.mxu0 0
    %619 = vmatpush1.bf16.msra.mxu0 %v487
    %620 = vmatprep.subr.bf16.mxu0 0
    %621 = vmatpush1.bf16.msra.mxu0 %v488
    %622 = vmatprep.subr.bf16.mxu0 0
    %623 = vmatpush1.bf16.msra.mxu0 %v489
    %624 = vmatprep.subr.bf16.mxu0 0
    %625 = vmatpush1.bf16.msra.mxu0 %v490
    %626 = vmatprep.subr.bf16.mxu0 0
    %627 = vmatpush1.bf16.msra.mxu0 %v491
    %628 = vmatprep.subr.bf16.mxu0 0
    %629 = vmatpush1.bf16.msra.mxu0 %v492
    %630 = vmatprep.subr.bf16.mxu0 0
    %631 = vmatpush1.bf16.msra.mxu0 %v493
    %632 = vmatprep.subr.bf16.mxu0 0
    %633 = vmatpush1.bf16.msra.mxu0 %v494
    %634 = vmatprep.subr.bf16.mxu0 0
    %635 = vmatpush1.bf16.msra.mxu0 %v495
    %636 = vmatprep.subr.bf16.mxu0 0
    %637 = vmatpush1.bf16.msra.mxu0 %v496
    %638 = vmatprep.subr.bf16.mxu0 0
    %639 = vmatpush1.bf16.msra.mxu0 %v497
    %640 = vmatprep.subr.bf16.mxu0 0
    %641 = vmatpush1.bf16.msra.mxu0 %v498
    %642 = vmatprep.subr.bf16.mxu0 0
    %643 = vmatpush1.bf16.msra.mxu0 %v499
    %644 = vmatprep.mubr.bf16.mxu0 %v213
    %645 = vmatmul.mubr.bf16.gmra.mrb[0].mxu0 %v212
    %v646 = vpop.f32.mrb[0].mxu0
    %v647 = vadd.f32 %v198, %v646
    %v648 = vpop.f32.mrb[0].mxu0
    %v649 = vpop.f32.mrb[0].mxu0
    %v650 = vpop.f32.mrb[0].mxu0
    %651 = vdwg.mxu0
    %652 = vmatprep.subr.bf16.mxu0 0
    %653 = vmatpush1.bf16.msra.mxu0 %v500
    %654 = vmatprep.subr.bf16.mxu0 0
    %655 = vmatpush1.bf16.msra.mxu0 %v501
    %656 = vmatprep.subr.bf16.mxu0 0
    %657 = vmatpush1.bf16.msra.mxu0 %v502
    %658 = vmatprep.subr.bf16.mxu0 0
    %659 = vmatpush1.bf16.msra.mxu0 %v503
    %660 = vmatprep.subr.bf16.mxu0 0
    %661 = vmatpush1.bf16.msra.mxu0 %v504
    %662 = vmatprep.subr.bf16.mxu0 0
    %663 = vmatpush1.bf16.msra.mxu0 %v505
    %664 = vmatprep.subr.bf16.mxu0 0
    %665 = vmatpush1.bf16.msra.mxu0 %v506
    %666 = vmatprep.subr.bf16.mxu0 0
    %667 = vmatpush1.bf16.msra.mxu0 %v507
    %668 = vmatprep.subr.bf16.mxu0 0
    %669 = vmatpush1.bf16.msra.mxu0 %v508
    %670 = vmatprep.subr.bf16.mxu0 0
    %671 = vmatpush1.bf16.msra.mxu0 %v509
    %672 = vmatprep.subr.bf16.mxu0 0
    %673 = vmatpush1.bf16.msra.mxu0 %v510
    %674 = vmatprep.subr.bf16.mxu0 0
    %675 = vmatpush1.bf16.msra.mxu0 %v511
    %676 = vmatprep.subr.bf16.mxu0 0
    %677 = vmatpush1.bf16.msra.mxu0 %v512
    %678 = vmatprep.subr.bf16.mxu0 0
    %679 = vmatpush1.bf16.msra.mxu0 %v513
    %680 = vmatprep.subr.bf16.mxu0 0
    %681 = vmatpush1.bf16.msra.mxu0 %v514
    %682 = vmatprep.subr.bf16.mxu0 0
    %683 = vmatpush1.bf16.msra.mxu0 %v515
    %684 = vmatprep.mubr.bf16.mxu0 %v215
    %685 = vmatmul.mubr.bf16.gmra.mrb[0].mxu0 %v214
    %v686 = vpop.f32.mrb[0].mxu0
    %v687 = vadd.f32 %v647, %v686
    %v688 = vpop.f32.mrb[0].mxu0
    %v689 = vpop.f32.mrb[0].mxu0
    %v690 = vpop.f32.mrb[0].mxu0
    %691 = vdwg.mxu0
    %692 = vmatprep.subr.bf16.mxu0 0
    %693 = vmatpush1.bf16.msra.mxu0 %v516
    %694 = vmatprep.subr.bf16.mxu0 0
    %695 = vmatpush1.bf16.msra.mxu0 %v517
    %696 = vmatprep.subr.bf16.mxu0 0
    %697 = vmatpush1.bf16.msra.mxu0 %v518
    %698 = vmatprep.subr.bf16.mxu0 0
    %699 = vmatpush1.bf16.msra.mxu0 %v519
    %700 = vmatprep.subr.bf16.mxu0 0
    %701 = vmatpush1.bf16.msra.mxu0 %v520
    %702 = vmatprep.subr.bf16.mxu0 0
    %703 = vmatpush1.bf16.msra.mxu0 %v521
    %704 = vmatprep.subr.bf16.mxu0 0
    %705 = vmatpush1.bf16.msra.mxu0 %v522
    %706 = vmatprep.subr.bf16.mxu0 0
    %707 = vmatpush1.bf16.msra.mxu0 %v523
    %708 = vmatprep.subr.bf16.mxu0 0
    %709 = vmatpush1.bf16.msra.mxu0 %v524
    %710 = vmatprep.subr.bf16.mxu0 0
    %711 = vmatpush1.bf16.msra.mxu0 %v525
    %712 = vmatprep.subr.bf16.mxu0 0
    %713 = vmatpush1.bf16.msra.mxu0 %v526
    %714 = vmatprep.subr.bf16.mxu0 0
    %715 = vmatpush1.bf16.msra.mxu0 %v527
    %716 = vmatprep.subr.bf16.mxu0 0
    %717 = vmatpush1.bf16.msra.mxu0 %v528
    %718 = vmatprep.subr.bf16.mxu0 0
    %719 = vmatpush1.bf16.msra.mxu0 %v529
    %720 = vmatprep.subr.bf16.mxu0 0
    %721 = vmatpush1.bf16.msra.mxu0 %v530
    %722 = vmatprep.subr.bf16.mxu0 0
    %723 = vmatpush1.bf16.msra.mxu0 %v531
    %724 = vmatprep.mubr.bf16.mxu0 %v217
    %725 = vmatmul.mubr.bf16.gmra.mrb[0].mxu0 %v216
    %v726 = vpop.f32.mrb[0].mxu0
    %v727 = vadd.f32 %v687, %v726
    %v728 = vpop.f32.mrb[0].mxu0
    %v729 = vpop.f32.mrb[0].mxu0
    %v730 = vpop.f32.mrb[0].mxu0
    %731 = vdwg.mxu0
    %732 = vmatprep.subr.bf16.mxu0 0
    %733 = vmatpush1.bf16.msra.mxu0 %v532
    %734 = vmatprep.subr.bf16.mxu0 0
    %735 = vmatpush1.bf16.msra.mxu0 %v533
    %736 = vmatprep.subr.bf16.mxu0 0
    %737 = vmatpush1.bf16.msra.mxu0 %v534
    %738 = vmatprep.subr.bf16.mxu0 0
    %739 = vmatpush1.bf16.msra.mxu0 %v535
    %740 = vmatprep.subr.bf16.mxu0 0
    %741 = vmatpush1.bf16.msra.mxu0 %v536
    %742 = vmatprep.subr.bf16.mxu0 0
    %743 = vmatpush1.bf16.msra.mxu0 %v537
    %744 = vmatprep.subr.bf16.mxu0 0
    %745 = vmatpush1.bf16.msra.mxu0 %v538
    %746 = vmatprep.subr.bf16.mxu0 0
    %747 = vmatpush1.bf16.msra.mxu0 %v539
    %748 = vmatprep.subr.bf16.mxu0 0
    %749 = vmatpush1.bf16.msra.mxu0 %v540
    %750 = vmatprep.subr.bf16.mxu0 0
    %751 = vmatpush1.bf16.msra.mxu0 %v541
    %752 = vmatprep.subr.bf16.mxu0 0
    %753 = vmatpush1.bf16.msra.mxu0 %v542
    %754 = vmatprep.subr.bf16.mxu0 0
    %755 = vmatpush1.bf16.msra.mxu0 %v543
    %756 = vmatprep.subr.bf16.mxu0 0
    %757 = vmatpush1.bf16.msra.mxu0 %v544
    %758 = vmatprep.subr.bf16.mxu0 0
    %759 = vmatpush1.bf16.msra.mxu0 %v545
    %760 = vmatprep.subr.bf16.mxu0 0
    %761 = vmatpush1.bf16.msra.mxu0 %v546
    %762 = vmatprep.subr.bf16.mxu0 0
    %763 = vmatpush1.bf16.msra.mxu0 %v547
    %764 = vmatprep.mubr.bf16.mxu0 %v219
    %765 = vmatmul.mubr.bf16.gmra.mrb[0].mxu0 %v218
    %v766 = vpop.f32.mrb[0].mxu0
    %v767 = vadd.f32 %v727, %v766
    %v768 = vpop.f32.mrb[0].mxu0
    %v769 = vpop.f32.mrb[0].mxu0
    %v770 = vpop.f32.mrb[0].mxu0
    %771 = vdwg.mxu0
    %v772 = vmax.f32 %v767, 0.0
    %v773 = vpack.c.bf16 %v772, %v772
    %v774 = vld [vmem:[#allocation7] sm:$0xf]
    %v775 = vld [vmem:[#allocation7 + $0x4] sm:$0xf]
    %v776 = vld [vmem:[#allocation7 + $0x8] sm:$0xf]
    %v777 = vld [vmem:[#allocation7 + $0xc] sm:$0xf]
    %v778 = vld [vmem:[#allocation7 + $0x10] sm:$0xf]
    %v779 = vld [vmem:[#allocation7 + $0x14] sm:$0xf]
    %v780 = vld [vmem:[#allocation7 + $0x18] sm:$0xf]
    %v781 = vld [vmem:[#allocation7 + $0x1c] sm:$0xf]
    %v782 = vld [vmem:[#allocation7 + $0x20] sm:$0xf]
    %v783 = vld [vmem:[#allocation7 + $0x24] sm:$0xf]
    %v784 = vld [vmem:[#allocation7 + $0x28] sm:$0xf]
    %v785 = vld [vmem:[#allocation7 + $0x2c] sm:$0xf]
    %v786 = vld [vmem:[#allocation7 + $0x30] sm:$0xf]
    %v787 = vld [vmem:[#allocation7 + $0x34] sm:$0xf]
    %v788 = vld [vmem:[#allocation7 + $0x38] sm:$0xf]
    %v789 = vld [vmem:[#allocation7 + $0x3c] sm:$0xf]
    %v790 = vld [vmem:[%s4] sm:$0x1]
    %v792 = vlaneseq
    %v793 = vshrl.u32 %v792, 7
    %v794 = vsub.s32 0, %v793
    %v795 = vrot.slane %v790, %v794
    %v813 = vunpack.c.l.b16 %v774
    %v814 = vunpack.c.l.b16 %v775
    %v815 = vunpack.c.l.b16 %v776
    %v816 = vunpack.c.l.b16 %v777
    %v817 = vunpack.c.l.b16 %v778
    %v818 = vunpack.c.l.b16 %v779
    %v819 = vunpack.c.l.b16 %v780
    %v820 = vunpack.c.l.b16 %v781
    %v821 = vunpack.c.l.b16 %v782
    %v822 = vunpack.c.l.b16 %v783
    %v823 = vunpack.c.l.b16 %v784
    %v824 = vunpack.c.l.b16 %v785
    %v825 = vunpack.c.l.b16 %v786
    %v826 = vunpack.c.l.b16 %v787
    %v827 = vunpack.c.l.b16 %v788
    %v828 = vunpack.c.l.b16 %v789
    %v829 = vpack.c.b16 %v814, %v813
    %v830 = vpack.c.b16 %v816, %v815
    %v831 = vpack.c.b16 %v818, %v817
    %v832 = vpack.c.b16 %v820, %v819
    %v833 = vpack.c.b16 %v822, %v821
    %v834 = vpack.c.b16 %v824, %v823
    %v835 = vpack.c.b16 %v826, %v825
    %v836 = vpack.c.b16 %v828, %v827
    %845 = vmatprep.subr.bf16.mxu0 0
    %846 = vmatpush1.bf16.msra.mxu0 %v829
    %847 = vmatprep.subr.bf16.mxu0 0
    %848 = vmatpush1.bf16.msra.mxu0 %v830
    %849 = vmatprep.subr.bf16.mxu0 0
    %850 = vmatpush1.bf16.msra.mxu0 %v831
    %851 = vmatprep.subr.bf16.mxu0 0
    %852 = vmatpush1.bf16.msra.mxu0 %v832
    %853 = vmatprep.subr.bf16.mxu0 0
    %854 = vmatpush1.bf16.msra.mxu0 %v833
    %855 = vmatprep.subr.bf16.mxu0 0
    %856 = vmatpush1.bf16.msra.mxu0 %v834
    %857 = vmatprep.subr.bf16.mxu0 0
    %858 = vmatpush1.bf16.msra.mxu0 %v835
    %859 = vmatprep.subr.bf16.mxu0 0
    %860 = vmatpush1.bf16.msra.mxu0 %v836
    %861 = vmatprep.subr.bf16.mxu0 0
    %862 = vmatpush1.bf16.msra.mxu0 0
    %863 = vmatprep.subr.bf16.mxu0 0
    %864 = vmatpush1.bf16.msra.mxu0 0
    %865 = vmatprep.subr.bf16.mxu0 0
    %866 = vmatpush1.bf16.msra.mxu0 0
    %867 = vmatprep.subr.bf16.mxu0 0
    %868 = vmatpush1.bf16.msra.mxu0 0
    %869 = vmatprep.subr.bf16.mxu0 0
    %870 = vmatpush1.bf16.msra.mxu0 0
    %871 = vmatprep.subr.bf16.mxu0 0
    %872 = vmatpush1.bf16.msra.mxu0 0
    %873 = vmatprep.subr.bf16.mxu0 0
    %874 = vmatpush1.bf16.msra.mxu0 0
    %875 = vmatprep.subr.bf16.mxu0 0
    %876 = vmatpush1.bf16.msra.mxu0 0
    %877 = vmatprep.mubr.bf16.mxu0 0
    %878 = vmatmul.mubr.bf16.gmra.mrb[0].mxu0 %v773
    %v879 = vpop.f32.mrb[0].mxu0
    %v880 = vadd.f32 %v795, %v879
    %v881 = vpop.f32.mrb[0].mxu0
    %v882 = vpop.f32.mrb[0].mxu0
    %v883 = vpop.f32.mrb[0].mxu0
    %884 = vdwg.mxu0
    %885 = vst [vmem:[#allocation8] sm:$0xff] %v880
    // Predicated region
    $region34: #{tpu_custom_call.1} parent=1 // pred_check
      _
    $region35: #{tpu_custom_call.1} parent=1 // pred_check_branch
      %887 = sbr.rel (0) target = $region37
    $region36: #{tpu_custom_call.1} parent=1 // pred_region
      %s889 = ssub.s32 128, 128
      %890 = vsyncadd [#allocation4], %s889
      %s892 = sshll.u32 [#allocation8], 4
      %s893 = int_to_ptr.vmem [resolvable:$true] %s892
      %895 = dma.vmem_to_hbm [thread:$0]  %s893, 128, %s5, [#allocation4]
    $region37: #{tpu_custom_call.1} parent=1 // pred_fallthru
      _
    // Predicated region
    $region38: #{tpu_custom_call.1} parent=1 // pred_check
      _
    $region39: #{tpu_custom_call.1} parent=1 // pred_check_branch
      %897 = sbr.rel (0) target = $region41
    $region40: #{tpu_custom_call.1} parent=1 // pred_region
      %898 = dma.done [#allocation4], 128
    $region41: #{tpu_custom_call.1} parent=1 // pred_fallthru
      _
    %899 = vsyncpa [#allocation3], 1
    %900 = vsyncpa [#allocation6], 1
    %901 = vsyncpa [#allocation4], 1

</llo_original>
